<compile_context>
chip_gen: v7x
topology: tpu7x:2x2x1
jax: 0.10.0
libtpu: 0.0.40
codegen_flags: <defaults>
</compile_context>

<pallas_src>
import jax
import jax.numpy as jnp
from jax.experimental import pallas as pl
from jax.experimental.pallas import tpu as pltpu

FOCAL_LENGTH = 5000.0

_LANE = 128
_SUBLANE = 8
_MAX_ROWS_PER_TILE = 512  # (512,128) f32 slab per plane -> ~2.6 MiB double-buffered


def _round_up(a, b):
    return -(-a // b) * b


def _perspective_camera_kernel(cam_ref, pts_ref, out_ref):
    # cam_ref : SMEM (B, 16) float32 scalar-prefetch table
    #           [r00..r22, tx, ty, tz, fx, fy, cx, cy] per batch row
    # pts_ref : VMEM (1, 3, ROWS, 128)  x/y/z planes (sublane-dense slabs)
    # out_ref : VMEM (1, 2, ROWS, 128)  u/v planes
    b = pl.program_id(0)

    r00 = cam_ref[b, 0]
    r01 = cam_ref[b, 1]
    r02 = cam_ref[b, 2]
    r10 = cam_ref[b, 3]
    r11 = cam_ref[b, 4]
    r12 = cam_ref[b, 5]
    r20 = cam_ref[b, 6]
    r21 = cam_ref[b, 7]
    r22 = cam_ref[b, 8]
    tx = cam_ref[b, 9]
    ty = cam_ref[b, 10]
    tz = cam_ref[b, 11]
    fx = cam_ref[b, 12]
    fy = cam_ref[b, 13]
    cx = cam_ref[b, 14]
    cy = cam_ref[b, 15]

    x = pts_ref[0, 0].astype(jnp.float32)  # (ROWS, 128)
    y = pts_ref[0, 1].astype(jnp.float32)
    z = pts_ref[0, 2].astype(jnp.float32)

    # camera_transform = [R | t]; homogeneous coordinate is implicitly 1.
    xc = r00 * x + r01 * y + r02 * z + tx
    yc = r10 * x + r11 * y + r12 * z + ty
    zc = r20 * x + r21 * y + r22 * z + tz

    # Single exact reciprocal shared between u and v (matches torch.div at f32).
    inv_z = 1.0 / zc
    out_ref[0, 0] = (fx * (xc * inv_z) + cx).astype(out_ref.dtype)
    out_ref[0, 1] = (fy * (yc * inv_z) + cy).astype(out_ref.dtype)


def perspective_camera_forward_planar(points_planar, rotation, translation,
                                      focal_length_x, focal_length_y, center):
    """Fast path: points_planar (B, 3, N) -> img_points_planar (B, 2, N).

    No HBM relayout: the (B, 3, N) planes are only reshaped (free) to
    (B, 3, rows, 128) slabs for the kernel.
    """
    B, three, N = points_planar.shape
    assert three == 3
    dtype = points_planar.dtype

    # Camera-parameter table stays float32 regardless of the points dtype.
    cam_params = jnp.concatenate(
        [
            rotation.reshape(B, 9).astype(jnp.float32),
            translation.reshape(B, 3).astype(jnp.float32),
            focal_length_x.reshape(B, 1).astype(jnp.float32),
            focal_length_y.reshape(B, 1).astype(jnp.float32),
            center.reshape(B, 2).astype(jnp.float32),
        ],
        axis=-1,
    )  # (B, 16) float32

    rows_needed = -(-N // _LANE)
    rows_per_tile = min(_MAX_ROWS_PER_TILE, _round_up(rows_needed, _SUBLANE))
    total_rows = _round_up(rows_needed, rows_per_tile)
    n_padded = total_rows * _LANE
    n_tiles = total_rows // rows_per_tile

    if n_padded != N:
        # Pad with 1.0 so the perspective divide stays finite on padded lanes.
        points_planar = jnp.pad(
            points_planar, ((0, 0), (0, 0), (0, n_padded - N)),
            constant_values=1.0)
    pts4 = points_planar.reshape(B, 3, total_rows, _LANE)

    out4 = pl.pallas_call(
        _perspective_camera_kernel,
        out_shape=jax.ShapeDtypeStruct((B, 2, total_rows, _LANE), dtype),
        grid_spec=pltpu.PrefetchScalarGridSpec(
            num_scalar_prefetch=1,
            grid=(B, n_tiles),
            in_specs=[
                pl.BlockSpec((1, 3, rows_per_tile, _LANE),
                             lambda b, n, cam: (b, 0, n, 0)),
            ],
            out_specs=pl.BlockSpec((1, 2, rows_per_tile, _LANE),
                                   lambda b, n, cam: (b, 0, n, 0)),
        ),
        compiler_params=pltpu.CompilerParams(
            dimension_semantics=("parallel", "parallel")),
    )(cam_params, pts4)

    return out4.reshape(B, 2, n_padded)[:, :, :N]


def perspective_camera_forward(points, rotation, translation,
                               focal_length_x, focal_length_y, center):
    """PyTorch-compatible contract: points (B, N, 3) -> img_points (B, N, 2).

    The transposes exist only to honor the original layout; performance-
    sensitive callers should use perspective_camera_forward_planar directly.
    """
    pts_planar = jnp.transpose(points, (0, 2, 1))         # (B, 3, N)
    out_planar = perspective_camera_forward_planar(
        pts_planar, rotation, translation, focal_length_x, focal_length_y,
        center)                                            # (B, 2, N)
    return jnp.transpose(out_planar, (0, 2, 1))            # (B, N, 2)


def _reference_forward(points, rotation, translation,
                       focal_length_x, focal_length_y, center):
    """Pure-JAX reproduction of the PyTorch forward, for verification."""
    B = points.shape[0]
    cam_transform = jnp.concatenate(
        [rotation, translation[:, :, None]], axis=-1)                     # (B,3,4)
    ones = jnp.ones(points.shape[:-1] + (1,), points.dtype)
    points_h = jnp.concatenate([points, ones], axis=-1)                   # (B,N,4)
    projected = jnp.einsum('bki,bji->bjk', cam_transform, points_h)       # (B,N,3)
    img = projected[:, :, :2] / projected[:, :, 2:3]
    cam_mat = jnp.zeros((B, 2, 2), points.dtype)
    cam_mat = cam_mat.at[:, 0, 0].set(focal_length_x).at[:, 1, 1].set(focal_length_y)
    img = jnp.einsum('bki,bji->bjk', cam_mat, img) + center[:, None, :]
    return img


if __name__ == "__main__":
    B, N = 2, 200  # small demo shapes; N deliberately not a multiple of 128
    dtype = jnp.float32
    key = jax.random.PRNGKey(0)
    k_pts, k_rot, k_trn = jax.random.split(key, 3)

    # Deterministic "parameter" init mirroring the module defaults, with small
    # perturbations so the rotation / translation paths are actually exercised.
    rotation = (jnp.eye(3, dtype=dtype)[None].repeat(B, axis=0)
                + 0.05 * jax.random.normal(k_rot, (B, 3, 3), dtype))
    translation = (jnp.array([0.0, 0.0, 5.0], dtype)[None].repeat(B, axis=0)
                   + 0.1 * jax.random.normal(k_trn, (B, 3), dtype))
    focal_length_x = jnp.full((B,), FOCAL_LENGTH, dtype)
    focal_length_y = jnp.full((B,), FOCAL_LENGTH, dtype)
    center = jnp.zeros((B, 2), dtype)

    # Points with bounded magnitude so depth (z_cam) stays well away from zero.
    points = jax.random.normal(k_pts, (B, N, 3), dtype)

    fwd = jax.jit(perspective_camera_forward)
    img_points = fwd(points, rotation, translation,
                     focal_length_x, focal_length_y, center)
    img_points = jax.block_until_ready(img_points)

    ref = _reference_forward(
        points, rotation, translation, focal_length_x, focal_length_y, center)

    assert img_points.shape == (B, N, 2)
    assert img_points.dtype == dtype
    assert jnp.allclose(img_points, ref, rtol=1e-5, atol=1e-3), (
        f"max abs err = {jnp.max(jnp.abs(img_points - ref))}")

    print("KERNEL_OK")
</pallas_src>

<mosaic_0001>
module attributes {stable_mosaic.version = 11 : i64} {
  func.func @_perspective_camera_kernel(%arg0: i32, %arg1: i32, %arg2: memref<2x16xf32, #tpu.memory_space<smem>>, %arg3: memref<1x3x8x128xf32, #tpu.memory_space<vmem>>, %arg4: memref<1x2x8x128xf32, #tpu.memory_space<vmem>>) attributes {dimension_semantics = [#tpu.dimension_semantics<parallel>, #tpu.dimension_semantics<parallel>], iteration_bounds = array<i64: 2, 1>, scalar_prefetch = 1 : i64, scratch_operands = 0 : i64, tpu.core_type = #tpu.core_type<tc>, window_params = [{transform_indices = @transform_0, window_bounds = array<i64: 1, 3, 8, 128>}, {transform_indices = @transform_1, window_bounds = array<i64: 1, 2, 8, 128>}]} {
    %0 = arith.index_cast %arg0 : i32 to index
    %c0 = arith.constant 0 : index
    %1 = memref.load %arg2[%0, %c0] : memref<2x16xf32, #tpu.memory_space<smem>>
    %2 = arith.index_cast %arg0 : i32 to index
    %c1 = arith.constant 1 : index
    %3 = memref.load %arg2[%2, %c1] : memref<2x16xf32, #tpu.memory_space<smem>>
    %4 = arith.index_cast %arg0 : i32 to index
    %c2 = arith.constant 2 : index
    %5 = memref.load %arg2[%4, %c2] : memref<2x16xf32, #tpu.memory_space<smem>>
    %6 = arith.index_cast %arg0 : i32 to index
    %c3 = arith.constant 3 : index
    %7 = memref.load %arg2[%6, %c3] : memref<2x16xf32, #tpu.memory_space<smem>>
    %8 = arith.index_cast %arg0 : i32 to index
    %c4 = arith.constant 4 : index
    %9 = memref.load %arg2[%8, %c4] : memref<2x16xf32, #tpu.memory_space<smem>>
    %10 = arith.index_cast %arg0 : i32 to index
    %c5 = arith.constant 5 : index
    %11 = memref.load %arg2[%10, %c5] : memref<2x16xf32, #tpu.memory_space<smem>>
    %12 = arith.index_cast %arg0 : i32 to index
    %c6 = arith.constant 6 : index
    %13 = memref.load %arg2[%12, %c6] : memref<2x16xf32, #tpu.memory_space<smem>>
    %14 = arith.index_cast %arg0 : i32 to index
    %c7 = arith.constant 7 : index
    %15 = memref.load %arg2[%14, %c7] : memref<2x16xf32, #tpu.memory_space<smem>>
    %16 = arith.index_cast %arg0 : i32 to index
    %c8 = arith.constant 8 : index
    %17 = memref.load %arg2[%16, %c8] : memref<2x16xf32, #tpu.memory_space<smem>>
    %18 = arith.index_cast %arg0 : i32 to index
    %c9 = arith.constant 9 : index
    %19 = memref.load %arg2[%18, %c9] : memref<2x16xf32, #tpu.memory_space<smem>>
    %20 = arith.index_cast %arg0 : i32 to index
    %c10 = arith.constant 10 : index
    %21 = memref.load %arg2[%20, %c10] : memref<2x16xf32, #tpu.memory_space<smem>>
    %22 = arith.index_cast %arg0 : i32 to index
    %c11 = arith.constant 11 : index
    %23 = memref.load %arg2[%22, %c11] : memref<2x16xf32, #tpu.memory_space<smem>>
    %24 = arith.index_cast %arg0 : i32 to index
    %c12 = arith.constant 12 : index
    %25 = memref.load %arg2[%24, %c12] : memref<2x16xf32, #tpu.memory_space<smem>>
    %26 = arith.index_cast %arg0 : i32 to index
    %c13 = arith.constant 13 : index
    %27 = memref.load %arg2[%26, %c13] : memref<2x16xf32, #tpu.memory_space<smem>>
    %28 = arith.index_cast %arg0 : i32 to index
    %c14 = arith.constant 14 : index
    %29 = memref.load %arg2[%28, %c14] : memref<2x16xf32, #tpu.memory_space<smem>>
    %30 = arith.index_cast %arg0 : i32 to index
    %c15 = arith.constant 15 : index
    %31 = memref.load %arg2[%30, %c15] : memref<2x16xf32, #tpu.memory_space<smem>>
    %c0_0 = arith.constant 0 : index
    %c0_1 = arith.constant 0 : index
    %c0_2 = arith.constant 0 : index
    %c0_3 = arith.constant 0 : index
    %32 = vector.load %arg3[%c0_0, %c0_1, %c0_2, %c0_3] : memref<1x3x8x128xf32, #tpu.memory_space<vmem>>, vector<1x1x8x128xf32>
    %33 = vector.shape_cast %32 : vector<1x1x8x128xf32> to vector<8x128xf32>
    %c0_4 = arith.constant 0 : index
    %c1_5 = arith.constant 1 : index
    %c0_6 = arith.constant 0 : index
    %c0_7 = arith.constant 0 : index
    %34 = vector.load %arg3[%c0_4, %c1_5, %c0_6, %c0_7] : memref<1x3x8x128xf32, #tpu.memory_space<vmem>>, vector<1x1x8x128xf32>
    %35 = vector.shape_cast %34 : vector<1x1x8x128xf32> to vector<8x128xf32>
    %c0_8 = arith.constant 0 : index
    %c2_9 = arith.constant 2 : index
    %c0_10 = arith.constant 0 : index
    %c0_11 = arith.constant 0 : index
    %36 = vector.load %arg3[%c0_8, %c2_9, %c0_10, %c0_11] : memref<1x3x8x128xf32, #tpu.memory_space<vmem>>, vector<1x1x8x128xf32>
    %37 = vector.shape_cast %36 : vector<1x1x8x128xf32> to vector<8x128xf32>
    %38 = vector.broadcast %1 : f32 to vector<8x128xf32>
    %39 = arith.mulf %38, %33 : vector<8x128xf32>
    %40 = vector.broadcast %3 : f32 to vector<8x128xf32>
    %41 = arith.mulf %40, %35 : vector<8x128xf32>
    %42 = arith.addf %39, %41 : vector<8x128xf32>
    %43 = vector.broadcast %5 : f32 to vector<8x128xf32>
    %44 = arith.mulf %43, %37 : vector<8x128xf32>
    %45 = arith.addf %42, %44 : vector<8x128xf32>
    %46 = vector.broadcast %19 : f32 to vector<8x128xf32>
    %47 = arith.addf %45, %46 : vector<8x128xf32>
    %48 = vector.broadcast %7 : f32 to vector<8x128xf32>
    %49 = arith.mulf %48, %33 : vector<8x128xf32>
    %50 = vector.broadcast %9 : f32 to vector<8x128xf32>
    %51 = arith.mulf %50, %35 : vector<8x128xf32>
    %52 = arith.addf %49, %51 : vector<8x128xf32>
    %53 = vector.broadcast %11 : f32 to vector<8x128xf32>
    %54 = arith.mulf %53, %37 : vector<8x128xf32>
    %55 = arith.addf %52, %54 : vector<8x128xf32>
    %56 = vector.broadcast %21 : f32 to vector<8x128xf32>
    %57 = arith.addf %55, %56 : vector<8x128xf32>
    %58 = vector.broadcast %13 : f32 to vector<8x128xf32>
    %59 = arith.mulf %58, %33 : vector<8x128xf32>
    %60 = vector.broadcast %15 : f32 to vector<8x128xf32>
    %61 = arith.mulf %60, %35 : vector<8x128xf32>
    %62 = arith.addf %59, %61 : vector<8x128xf32>
    %63 = vector.broadcast %17 : f32 to vector<8x128xf32>
    %64 = arith.mulf %63, %37 : vector<8x128xf32>
    %65 = arith.addf %62, %64 : vector<8x128xf32>
    %66 = vector.broadcast %23 : f32 to vector<8x128xf32>
    %67 = arith.addf %65, %66 : vector<8x128xf32>
    %cst = arith.constant 1.000000e+00 : f32
    %68 = vector.broadcast %cst : f32 to vector<8x128xf32>
    %69 = arith.divf %68, %67 : vector<8x128xf32>
    %70 = arith.mulf %47, %69 : vector<8x128xf32>
    %71 = vector.broadcast %25 : f32 to vector<8x128xf32>
    %72 = arith.mulf %71, %70 : vector<8x128xf32>
    %73 = vector.broadcast %29 : f32 to vector<8x128xf32>
    %74 = arith.addf %72, %73 : vector<8x128xf32>
    %c0_12 = arith.constant 0 : index
    %c0_13 = arith.constant 0 : index
    %c0_14 = arith.constant 0 : index
    %c0_15 = arith.constant 0 : index
    %75 = vector.load %arg4[%c0_12, %c0_13, %c0_14, %c0_15] : memref<1x2x8x128xf32, #tpu.memory_space<vmem>>, vector<1x1x8x128xf32>
    %76 = vector.shape_cast %75 : vector<1x1x8x128xf32> to vector<8x128xf32>
    %77 = vector.shape_cast %74 : vector<8x128xf32> to vector<1x1x8x128xf32>
    tpu.vector_store %arg4[%c0_12, %c0_13, %c0_14, %c0_15], %77 {strides = array<i32>} : memref<1x2x8x128xf32, #tpu.memory_space<vmem>>, vector<1x1x8x128xf32>,
    %78 = arith.mulf %57, %69 : vector<8x128xf32>
    %79 = vector.broadcast %27 : f32 to vector<8x128xf32>
    %80 = arith.mulf %79, %78 : vector<8x128xf32>
    %81 = vector.broadcast %31 : f32 to vector<8x128xf32>
    %82 = arith.addf %80, %81 : vector<8x128xf32>
    %c0_16 = arith.constant 0 : index
    %c1_17 = arith.constant 1 : index
    %c0_18 = arith.constant 0 : index
    %c0_19 = arith.constant 0 : index
    %83 = vector.load %arg4[%c0_16, %c1_17, %c0_18, %c0_19] : memref<1x2x8x128xf32, #tpu.memory_space<vmem>>, vector<1x1x8x128xf32>
    %84 = vector.shape_cast %83 : vector<1x1x8x128xf32> to vector<8x128xf32>
    %85 = vector.shape_cast %82 : vector<8x128xf32> to vector<1x1x8x128xf32>
    tpu.vector_store %arg4[%c0_16, %c1_17, %c0_18, %c0_19], %85 {strides = array<i32>} : memref<1x2x8x128xf32, #tpu.memory_space<vmem>>, vector<1x1x8x128xf32>,
    return
  }
  func.func @transform_0(%arg0: i32, %arg1: i32, %arg2: memref<2x16xf32, #tpu.memory_space<smem>>) -> (i32, i32, i32, i32) {
    %c0_i32 = arith.constant 0 : i32
    %c0_i32_0 = arith.constant 0 : i32
    %c0_i32_1 = arith.constant 0 : i32
    return %arg0, %c0_i32, %arg1, %c0_i32_0 : i32, i32, i32, i32
  }
  func.func @transform_1(%arg0: i32, %arg1: i32, %arg2: memref<2x16xf32, #tpu.memory_space<smem>>) -> (i32, i32, i32, i32) {
    %c0_i32 = arith.constant 0 : i32
    %c0_i32_0 = arith.constant 0 : i32
    %c0_i32_1 = arith.constant 0 : i32
    return %arg0, %c0_i32, %arg1, %c0_i32_0 : i32, i32, i32, i32
  }
}

</mosaic_0001>

<llo_original>
// kernel: perspective_camera_forward.1
$region0: #{perspective_camera_forward.1}
  #allocation0 [shape = 'u32[]', space=smem, size = 0x4, offset = 0x4, fixed_abs, tag = 'smem constant byte address 0x4 - core index']
  #allocation1 [shape = 'u32[144,128]{1,0:T(1,128)}', space=vmem, size = 0x12000, scoped, tag = 'internal scratch']
  #allocation2 [shape = 's32[1]{0}', space=sflag, size = 0x4, scoped, tag = 'scoped memory for perspective_camera_forward.1']
  #allocation3 [shape = 'u8[1024]{0}', space=smem, size = 0x400, scoped, tag = 'prefetched SMEM operand 0']
  %s0 = inlined_call_operand.vmem [shape: f32[2,16], index: 0, kind: input, shape index: {}]
  %s1 = inlined_call_operand.vmem [shape: f32[2,3,8,128], index: 1, kind: input, shape index: {}]
  %s2 = inlined_call_operand.vmem [shape: f32[2,2,8,128], index: 2, kind: output, shape index: {}]
  %s3 = sld [smem:[#allocation0]]
  $region37: #{perspective_camera_forward.1} parent=0
    _
  %s5 = ssub.s32 1, %s3
  %s6 = scalar_select 0, %s5, %s3
  %s7 = sshll.u32 %s0, 4
  %s8 = int_to_ptr.vmem [resolvable:$true] %s7
  %10 = dma.vmem_to_smem %s8, 32, [#allocation3], [#allocation2]
  %11 = dma.done [#allocation2], 32
  %12 = sfence
  loop: start=0, step=1, limit=4
  $region2: #{perspective_camera_forward.1} parent=0 // loop_pre_header
    _
  $region3: #{perspective_camera_forward.1} parent=0 // loop_header
    %s14 = sphi 0, %s18
    %p15 = scmp.ge.s32.totalorder %s14, 4
    %s21 = sphi 0, %s33
    %s22 = sphi 0, %s29
    %s23 = sphi 0, %s21
    %s24 = sphi 0, %s22
    %s25 = sphi 0, %s23
    %s26 = sphi 0, %s24
    %s38 = sphi 0, %s40
    %s41 = sphi 0, %s38
    %s42 = sphi 0, %s41
    %s58 = sphi 0, %s42
    %s66 = sphi 0, %s68
    %s69 = sphi 0, %s66
    %s70 = sphi 0, %s69
    %s86 = sphi 0, %s70
  $region4: #{perspective_camera_forward.1} parent=0 // loop_header_branch
    %17 = sbr.rel (%p15) target = $region8
  $region5: #{perspective_camera_forward.1} parent=0 // loop_body
    %s19 = ssub.s32 %s14, 1
    %s20 = ssub.s32 %s14, 2
    %s27 = sadd.s32 1, %s22
    %p28 = scmp.ge.s32.totalorder %s27, 1
    %s29 = scalar_select %p28, 0, %s27
    %s30 = sadd.s32 1, %s21
    %s31 = scalar_select %p28, %s30, %s21
    %p32 = scmp.ge.s32.totalorder %s31, 2
    %s33 = scalar_select %p32, 0, %s31
    %s34 = ssub.s32 %s21, %s33
    %s35 = ssub.s32 %s22, %s29
    %s36 = sor.u32 %s34, %s35
    %p37 = scmp.eq.s32.totalorder %s36, 0
    %s39 = sadd.s32 %s38, 1
    %s40 = scalar_select %p37, %s38, %s39
    %p43 = pneg %p37
    %p44 = scmp.eq.s32.totalorder %s14, 1
    %p45 = por %p43, %p44
    %p46 = scmp.ne.s32.totalorder %s38, %s41
    %p47 = scmp.eq.s32.totalorder %s14, 0
    %p48 = por %p46, %p47
    %p49 = scmp.ne.s32.totalorder %s38, %s41
    %p50 = scmp.eq.s32.totalorder %s19, 1
    %p51 = por %p49, %p50
    %p52 = scmp.ne.s32.totalorder %s41, %s42
    %p53 = scmp.eq.s32.totalorder %s19, 0
    %p54 = por %p52, %p53
    %p55 = scmp.ne.s32.totalorder %s41, %s42
    %p56 = scmp.eq.s32.totalorder %s20, 1
    %p57 = por %p55, %p56
    %p59 = scmp.ne.s32.totalorder %s42, %s58
    %p60 = scmp.eq.s32.totalorder %s20, 0
    %p61 = por %p59, %p60
    %s62 = ssub.s32 %s21, %s33
    %s63 = ssub.s32 %s22, %s29
    %s64 = sor.u32 %s62, %s63
    %p65 = scmp.eq.s32.totalorder %s64, 0
    %s67 = sadd.s32 %s66, 1
    %s68 = scalar_select %p65, %s66, %s67
    %p71 = pneg %p65
    %p72 = scmp.eq.s32.totalorder %s14, 1
    %p73 = por %p71, %p72
    %p74 = scmp.ne.s32.totalorder %s66, %s69
    %p75 = scmp.eq.s32.totalorder %s14, 0
    %p76 = por %p74, %p75
    %p77 = scmp.ne.s32.totalorder %s66, %s69
    %p78 = scmp.eq.s32.totalorder %s19, 1
    %p79 = por %p77, %p78
    %p80 = scmp.ne.s32.totalorder %s69, %s70
    %p81 = scmp.eq.s32.totalorder %s19, 0
    %p82 = por %p80, %p81
    %p83 = scmp.ne.s32.totalorder %s69, %s70
    %p84 = scmp.eq.s32.totalorder %s20, 1
    %p85 = por %p83, %p84
    %p87 = scmp.ne.s32.totalorder %s70, %s86
    %p88 = scmp.eq.s32.totalorder %s20, 0
    %p89 = por %p87, %p88
    %p90 = scmp.le.s32.totalorder 1, %s14
    %p91 = scmp.lt.s32.totalorder %s14, 3
    %p92 = pnand %p90, %p91
    %p93 = pneg %p92
    // Predicated region
    $region9: #{perspective_camera_forward.1} parent=5 // pred_check
      _
    $region10: #{perspective_camera_forward.1} parent=5 // pred_check_branch
      %95 = sbr.rel (%p92) target = $region12
    $region11: #{perspective_camera_forward.1} parent=5 // pred_region
      %s96 = ssub.s32 %s14, 1
    $region12: #{perspective_camera_forward.1} parent=5 // pred_fallthru
      _
    %p97 = scmp.lt.s32.totalorder %s14, 2
    // Predicated region
    $region13: #{perspective_camera_forward.1} parent=5 // pred_check
      %p98 = pneg %p97
    $region14: #{perspective_camera_forward.1} parent=5 // pred_check_branch
      %100 = sbr.rel (%p98) target = $region16
    $region15: #{perspective_camera_forward.1} parent=5 // pred_region
      // Predicated region
      $region17: #{perspective_camera_forward.1} parent=15 // pred_check
        %p101 = pneg %p48
      $region18: #{perspective_camera_forward.1} parent=15 // pred_check_branch
        %103 = sbr.rel (%p101) target = $region20
      $region19: #{perspective_camera_forward.1} parent=15 // pred_region
        %p104 = scmp.lt.s32.totalorder %s21, 1
        %s105 = scalar_select %p104, %s21, 1
        %p106 = scmp.lt.s32.totalorder %s22, 0
        %s107 = scalar_select %p106, %s22, 0
        %s108 = smul.addr %s105, 3
        %s109 = sadd.s32 %s107, %s108
        %s110 = smul.addr %s109, 8
        %s111 = scalar_lea.vmem %s1, %s110
      $region20: #{perspective_camera_forward.1} parent=15 // pred_fallthru
        _
    $region16: #{perspective_camera_forward.1} parent=5 // pred_fallthru
      _
    %p112 = scmp.le.s32.totalorder 1, %s14
    %p113 = scmp.lt.s32.totalorder %s14, 3
    %p114 = pnand %p112, %p113
    %p115 = pneg %p114
    // Predicated region
    $region21: #{perspective_camera_forward.1} parent=5 // pred_check
      _
    $region22: #{perspective_camera_forward.1} parent=5 // pred_check_branch
      %117 = sbr.rel (%p114) target = $region24
    $region23: #{perspective_camera_forward.1} parent=5 // pred_region
      %s118 = ssub.s32 %s14, 1
      %p119 = scmp.lt.s32.totalorder %s23, 1
      %s120 = scalar_select %p119, %s23, 1
      %p121 = scmp.lt.s32.totalorder %s24, 0
      %s122 = scalar_select %p121, %s24, 0
      %s123 = smul.addr %s120, 3
      %s124 = sadd.s32 %s122, %s123
      %s125 = smul.addr %s124, 8
      %s126 = scalar_lea.vmem %s1, %s125
      %p127 = pneg %p54
      %p128 = pneg %p51
      %p129 = pneg %p82
      %p130 = pneg %p79
      %p131 = scmp.lt.s32.totalorder %s23, 1
      %s132 = scalar_select %p131, %s23, 1
      %p133 = scmp.lt.s32.totalorder %s24, 0
      %s134 = scalar_select %p133, %s24, 0
      %s135 = smul.addr %s132, 2
      %s136 = sadd.s32 %s134, %s135
      %s137 = smul.addr %s136, 8
      %s138 = scalar_lea.vmem %s2, %s137
      %p139 = scmp.lt.s32.totalorder %s23, 1
      %s140 = scalar_select %p139, %s23, 1
      %p141 = scmp.lt.s32.totalorder %s24, 0
      %s142 = scalar_select %p141, %s24, 0
      %s143 = smul.addr %s140, 3
      %s144 = sadd.s32 %s142, %s143
      %s145 = smul.addr %s144, 8
      %s146 = scalar_lea.vmem %s1, %s145
      %p147 = scmp.lt.s32.totalorder %s23, 1
      %s148 = scalar_select %p147, %s23, 1
      %p149 = scmp.lt.s32.totalorder %s24, 0
      %s150 = scalar_select %p149, %s24, 0
      %s151 = smul.addr %s148, 2
      %s152 = sadd.s32 %s150, %s151
      %s153 = smul.addr %s152, 8
      %s154 = scalar_lea.vmem %s2, %s153
      %s155 = smul.u32 %s23, 128
      %s156 = sld [smem:[#allocation3 + %s155]]
      %s157 = sadd.s32 %s155, 1
      %s158 = sld [smem:[#allocation3 + %s157]]
      %s159 = sadd.s32 %s155, 2
      %s160 = sld [smem:[#allocation3 + %s159]]
      %s161 = sadd.s32 %s155, 3
      %s162 = sld [smem:[#allocation3 + %s161]]
      %s163 = sadd.s32 %s155, 4
      %s164 = sld [smem:[#allocation3 + %s163]]
      %s165 = sadd.s32 %s155, 5
      %s166 = sld [smem:[#allocation3 + %s165]]
      %s167 = sadd.s32 %s155, 6
      %s168 = sld [smem:[#allocation3 + %s167]]
      %s169 = sadd.s32 %s155, 7
      %s170 = sld [smem:[#allocation3 + %s169]]
      %s171 = sadd.s32 %s155, 8
      %s172 = sld [smem:[#allocation3 + %s171]]
      %s173 = sadd.s32 %s155, 9
      %s174 = sld [smem:[#allocation3 + %s173]]
      %s175 = sadd.s32 %s155, 10
      %s176 = sld [smem:[#allocation3 + %s175]]
      %s177 = sadd.s32 %s155, 11
      %s178 = sld [smem:[#allocation3 + %s177]]
      %s179 = sadd.s32 %s155, 12
      %s180 = sld [smem:[#allocation3 + %s179]]
      %s181 = sadd.s32 %s155, 13
      %s182 = sld [smem:[#allocation3 + %s181]]
      %s183 = sadd.s32 %s155, 14
      %s184 = sld [smem:[#allocation3 + %s183]]
      %s185 = sadd.s32 %s155, 15
      %s186 = sld [smem:[#allocation3 + %s185]]
      %v187 = vld [vmem:[%s146] sm:$0xff]
      %s188 = scalar_lea.vmem %s146, 8
      %v189 = vld [vmem:[%s188] sm:$0xff]
      %s190 = scalar_lea.vmem %s146, 16
      %v191 = vld [vmem:[%s190] sm:$0xff]
      %v192 = vstv %s156
      %v193 = vmul.f32 %v192, %v187
      %v194 = vstv %s158
      %v195 = vmul.f32 %v194, %v189
      %v196 = vadd.f32 %v193, %v195
      %v197 = vstv %s160
      %v198 = vmul.f32 %v197, %v191
      %v199 = vadd.f32 %v196, %v198
      %v200 = vstv %s174
      %v201 = vadd.f32 %v199, %v200
      %v202 = vstv %s162
      %v203 = vmul.f32 %v202, %v187
      %v204 = vstv %s164
      %v205 = vmul.f32 %v204, %v189
      %v206 = vadd.f32 %v203, %v205
      %v207 = vstv %s166
      %v208 = vmul.f32 %v207, %v191
      %v209 = vadd.f32 %v206, %v208
      %v210 = vstv %s176
      %v211 = vadd.f32 %v209, %v210
      %v212 = vstv %s168
      %v213 = vmul.f32 %v212, %v187
      %v214 = vstv %s170
      %v215 = vmul.f32 %v214, %v189
      %v216 = vadd.f32 %v213, %v215
      %v217 = vstv %s172
      %v218 = vmul.f32 %v217, %v191
      %v219 = vadd.f32 %v216, %v218
      %v220 = vstv %s178
      %v221 = vadd.f32 %v219, %v220
      %v222 = vrcp.pop %v221
      %v223 = vmul.f32 1.0, %v222
      %v224 = vmul.f32 %v201, %v223
      %v225 = vstv %s180
      %v226 = vmul.f32 %v225, %v224
      %v227 = vstv %s184
      %v228 = vadd.f32 %v226, %v227
      %229 = vst [vmem:[%s154] sm:$0xff] %v228
      %v230 = vmul.f32 %v211, %v223
      %v231 = vstv %s182
      %v232 = vmul.f32 %v231, %v230
      %v233 = vstv %s186
      %v234 = vadd.f32 %v232, %v233
      %s235 = scalar_lea.vmem %s154, 8
      %236 = vst [vmem:[%s235] sm:$0xff] %v234
      %p237 = scmp.lt.s32.totalorder %s23, 1
      %s238 = scalar_select %p237, %s23, 1
      %p239 = scmp.lt.s32.totalorder %s24, 0
      %s240 = scalar_select %p239, %s24, 0
      %s241 = smul.addr %s238, 2
      %s242 = sadd.s32 %s240, %s241
      %s243 = smul.addr %s242, 8
      %s244 = scalar_lea.vmem %s2, %s243
      // Predicated region
      $region25: #{perspective_camera_forward.1} parent=23 // pred_check
        %p245 = pneg %p79
      $region26: #{perspective_camera_forward.1} parent=23 // pred_check_branch
        %247 = sbr.rel (%p245) target = $region28
      $region27: #{perspective_camera_forward.1} parent=23 // pred_region
        _
      $region28: #{perspective_camera_forward.1} parent=23 // pred_fallthru
        _
    $region24: #{perspective_camera_forward.1} parent=5 // pred_fallthru
      _
    %p248 = scmp.le.s32.totalorder 2, %s14
    // Predicated region
    $region29: #{perspective_camera_forward.1} parent=5 // pred_check
      %p249 = pneg %p248
    $region30: #{perspective_camera_forward.1} parent=5 // pred_check_branch
      %251 = sbr.rel (%p249) target = $region32
    $region31: #{perspective_camera_forward.1} parent=5 // pred_region
      %s252 = ssub.s32 %s14, 2
      // Predicated region
      $region33: #{perspective_camera_forward.1} parent=31 // pred_check
        %p253 = pneg %p85
      $region34: #{perspective_camera_forward.1} parent=31 // pred_check_branch
        %255 = sbr.rel (%p253) target = $region36
      $region35: #{perspective_camera_forward.1} parent=31 // pred_region
        %p256 = scmp.lt.s32.totalorder %s25, 1
        %s257 = scalar_select %p256, %s25, 1
        %p258 = scmp.lt.s32.totalorder %s26, 0
        %s259 = scalar_select %p258, %s26, 0
        %s260 = smul.addr %s257, 2
        %s261 = sadd.s32 %s259, %s260
        %s262 = smul.addr %s261, 8
        %s263 = scalar_lea.vmem %s2, %s262
      $region36: #{perspective_camera_forward.1} parent=31 // pred_fallthru
        _
    $region32: #{perspective_camera_forward.1} parent=5 // pred_fallthru
      _
  $region6: #{perspective_camera_forward.1} parent=0 // loop_footer
    %s18 = sadd.s32 1, %s14
  $region7: #{perspective_camera_forward.1} parent=0 // loop_footer_branch
    %13 = sbr.rel target = $region3
  $region8: #{perspective_camera_forward.1} parent=0 // loop_exit
    _

</llo_original>
